<compile_context>
chip_gen: v6e
topology: v6e:2x2x1
jax: 0.10.0
libtpu: 0.0.40
codegen_flags: <defaults>
</compile_context>

<pallas_src>
import math

import jax
import jax.numpy as jnp
from jax import lax
from jax.experimental import pallas as pl
from jax.experimental.pallas import tpu as pltpu


# ---------------------------------------------------------------------------
# Synthetic architecture (mirrors what arch.txt would specify).
# ---------------------------------------------------------------------------
ARCH = ["4", "32", "relu", "32", "tanh", "2"]
_ACTS = ("relu", "sigmoid", "tanh")


def _round_up(n, m):
    return ((n + m - 1) // m) * m


def parse_arch(arch):
    inputlen = int(arch[0])
    ops = []  # ("linear", in, out) / ("relu",) / ("sigmoid",) / ("tanh",)
    for a in arch[1:]:
        if a.isdigit():
            ops.append(("linear", inputlen, int(a)))
            inputlen = int(a)
        elif a.lower() in _ACTS:
            ops.append((a.lower(),))
    return ops


OPS = parse_arch(ARCH)
IN_DIM = int(ARCH[0])
_LIN = [op for op in OPS if op[0] == "linear"]
OUT_DIM = _LIN[-1][2]

# Packed-parameter layout: one (PACK_ROWS, PACK_COLS) f32 buffer.
# Per linear layer (PyTorch (out, in) weight layout), a block of `rows` rows:
#   cols [0, fin) : weight
#   col  fin      : bias column
#                    - layer 0      : [b; 1]  (added explicitly in-kernel;
#                                      the trailing 1 seeds the carry row)
#                    - later layers : [b / c; 1 / c], c = value of the carry
#                                      row after the activations since the
#                                      previous linear, so bias folds into
#                                      the matmul itself.
#   rows: intermediate layers -> fout + 1 (carry row)
#         last layer          -> round_up(fout, 8) zero-padded rows, so the
#                                final on-tile transpose sees 8 sublanes.
MAX_IN = max(op[1] for op in _LIN)
PACK_COLS = MAX_IN + 1


def _build_plan(ops):
    """Static per-op plan baked into the kernel."""
    lin_idx = [i for i, op in enumerate(ops) if op[0] == "linear"]
    last = lin_idx[-1]
    plan, row = [], 0
    for i, op in enumerate(ops):
        if op[0] == "linear":
            _, fin, fout = op
            carry = i != last
            rows = fout + 1 if carry else _round_up(fout, 8)
            plan.append(("linear", row, rows, fout, fin, carry))
            row += rows
        else:
            plan.append(op)
    return tuple(plan), row


PLAN, PACK_ROWS = _build_plan(OPS)

_ACT_JNP = {
    "relu": lambda v: jnp.maximum(v, 0.0),
    "sigmoid": jax.nn.sigmoid,
    "tanh": jnp.tanh,
}
_ACT_SCALAR = {
    "relu": lambda v: max(v, 0.0),
    "sigmoid": lambda v: 1.0 / (1.0 + math.exp(-v)),
    "tanh": math.tanh,
}


# ---------------------------------------------------------------------------
# Parameter init (PyTorch nn.Linear default: U(-1/sqrt(fan_in), 1/sqrt(fan_in)))
# and one-time packing (all glue hoisted out of the forward path).
# ---------------------------------------------------------------------------
def init_params(key):
    params = []
    for op in OPS:
        if op[0] != "linear":
            continue
        _, fan_in, fan_out = op
        key, kw, kb = jax.random.split(key, 3)
        bound = 1.0 / jnp.sqrt(float(fan_in))
        w = jax.random.uniform(kw, (fan_out, fan_in), jnp.float32, -bound, bound)
        b = jax.random.uniform(kb, (fan_out,), jnp.float32, -bound, bound)
        params.append((w, b))
    return params


def pack_params(params):
    """Pack all W/b into one f32 buffer (done once at init, not per forward).

    Biases of layers after the first are folded into an extra "carry"
    column/row: the carry coordinate is 1.0 right after every linear, is
    mapped through the intervening activations, and the next layer's bias
    column is pre-divided by that value to compensate -- so later layers are
    pure matmuls inside the kernel.
    """
    blocks, li = [], 0
    carry_val, seen_linear = 1.0, False
    for op in PLAN:
        if op[0] == "linear":
            _, _row0, rows, fout, fin, carry = op
            w, b = params[li]
            li += 1
            blk = jnp.zeros((rows, PACK_COLS), jnp.float32)
            blk = blk.at[:fout, :fin].set(w)
            if not seen_linear:
                blk = blk.at[:fout, fin].set(b)          # added in-kernel
                if carry:
                    blk = blk.at[fout, fin].set(1.0)     # seeds the carry row
            else:
                blk = blk.at[:fout, fin].set(b / carry_val)
                if carry:
                    blk = blk.at[fout, fin].set(1.0 / carry_val)
            blocks.append(blk)
            carry_val, seen_linear = 1.0, True
        else:
            carry_val = _ACT_SCALAR[op[0]](carry_val)
    return jnp.concatenate(blocks, axis=0)


# ---------------------------------------------------------------------------
# Fused MLP kernel.  Internally lane-dense: h is (features[+carry], batch_tile).
# ---------------------------------------------------------------------------
def mlp_kernel(x_ref, p_ref, o_ref):
    x = x_ref[...].astype(jnp.float32)                     # (TB, IN_DIM)
    h = None
    for op in PLAN:
        if op[0] == "linear":
            _, row0, rows, _fout, fin, _carry = op
            if h is None:
                # Layer 0: h = W @ x^T + [b; 1].  Contracting on x's feature
                # axis (A @ B^T form) avoids an explicit transpose of the x
                # tile; the batch lands on the 128-wide lane axis.
                w = p_ref[row0:row0 + rows, 0:fin].astype(jnp.float32)
                bcol = p_ref[row0:row0 + rows, fin:fin + 1].astype(jnp.float32)
                h = lax.dot_general(
                    w, x, (((1,), (1,)), ((), ())),
                    preferred_element_type=jnp.float32) + bcol
            else:
                # Later layers: bias + carry row are baked into the packed
                # weight block -> a single MXU matmul, no bias extract.
                w = p_ref[row0:row0 + rows, 0:fin + 1].astype(jnp.float32)
                h = jnp.dot(w, h, preferred_element_type=jnp.float32)
        else:
            act = _ACT_JNP[op[0]]
            if h is None:
                x = act(x)
            else:
                h = act(h)
    # h: (rows_last, TB) feature-major (rows_last = round_up(OUT_DIM, 8)).
    # Transpose on-tile and drop the zero-padded rows -> batch-major store.
    out_bt = jnp.transpose(h)                              # (TB, rows_last)
    o_ref[...] = out_bt[:, :OUT_DIM].astype(o_ref.dtype)


_MAX_TILE = 4096  # (4096, 4) f32 x tile = 64 KiB; VMEM is a non-issue everywhere.


def neural_network_forward(x, packed_params, *, batch_tile=None):
    """Pallas-backed equivalent of NeuralNetwork.forward(x).

    x: (batch, IN_DIM) (PyTorch layout); returns (batch, OUT_DIM) float32.
    packed_params: output of pack_params() (built once, reused every call).
    The whole forward is one fused pallas_call -- no wrapper-side transposes
    or casts.
    """
    batch = x.shape[0]
    assert x.shape == (batch, IN_DIM)

    if batch_tile is None:
        if batch <= 256:
            tb = batch                         # single full-array block
        else:
            # Big tiles amortize the ~0.35us/step grid overhead; keep >= 2
            # steps so both v7x TensorCores get work from the "parallel"
            # axis (the extra step is noise on single-core v5e/v6e).
            tb = min(_round_up(pl.cdiv(batch, 2), 128), _MAX_TILE)
    else:
        tb = batch if batch_tile >= batch else _round_up(int(batch_tile), 128)

    grid = (pl.cdiv(batch, tb),)

    return pl.pallas_call(
        mlp_kernel,
        out_shape=jax.ShapeDtypeStruct((batch, OUT_DIM), jnp.float32),
        grid=grid,
        in_specs=[
            # x: (tb, IN_DIM) tiles along batch -> software-pipelined DMA.
            pl.BlockSpec((tb, IN_DIM), lambda i: (i, 0)),
            # packed params: one block, same index every step -> VMEM-resident.
            pl.BlockSpec((PACK_ROWS, PACK_COLS), lambda i: (0, 0)),
        ],
        out_specs=pl.BlockSpec((tb, OUT_DIM), lambda i: (i, 0)),
        compiler_params=pltpu.CompilerParams(
            dimension_semantics=("parallel",)),            # megacore split on v7x
    )(x, packed_params)


# ---------------------------------------------------------------------------
# Pure-JAX reference (same math as the PyTorch module).
# ---------------------------------------------------------------------------
def reference_forward(x, params):
    h = x
    li = 0
    for op in OPS:
        if op[0] == "linear":
            w, b = params[li]
            h = h @ w.T + b
            li += 1
        else:
            h = _ACT_JNP[op[0]](h)
    return h


if __name__ == "__main__":
    key = jax.random.PRNGKey(0)
    key, kx = jax.random.split(key)

    batch = 2
    x = jax.random.normal(kx, (batch, IN_DIM), jnp.float32)

    params = init_params(key)
    packed = pack_params(params)        # one-time glue, hoisted out of forward

    out = jax.block_until_ready(neural_network_forward(x, packed))
    ref = reference_forward(x, params)
    assert out.shape == ref.shape == (batch, OUT_DIM)
    # 1e-4: allows only accumulation-order noise between the two matmul paths.
    assert jnp.allclose(out, ref, atol=1e-4, rtol=1e-4)

    # Larger, non-multiple-of-128 batch: exercises the multi-step pipelined
    # grid (tb=512, grid=(2,)) including a partial edge tile.
    xb = jax.random.normal(jax.random.PRNGKey(1), (1000, IN_DIM), jnp.float32)
    outb = jax.block_until_ready(neural_network_forward(xb, packed))
    refb = reference_forward(xb, params)
    assert outb.shape == (1000, OUT_DIM)
    assert jnp.allclose(outb, refb, atol=1e-4, rtol=1e-4)

    print("KERNEL_OK")
</pallas_src>

<mosaic_0001>
module attributes {stable_mosaic.version = 11 : i64} {
  func.func @mlp_kernel(%arg0: i32, %arg1: memref<2x4xf32, #tpu.memory_space<vmem>>, %arg2: memref<74x33xf32, #tpu.memory_space<vmem>>, %arg3: memref<2x2xf32, #tpu.memory_space<vmem>>) attributes {dimension_semantics = [#tpu.dimension_semantics<parallel>], iteration_bounds = array<i64: 1>, scalar_prefetch = 0 : i64, scratch_operands = 0 : i64, tpu.core_type = #tpu.core_type<tc>, window_params = [{transform_indices = @transform_0, window_bounds = array<i64: 2, 4>}, {pipeline_mode = #tpu.pipeline_mode<synchronous>, transform_indices = @transform_1, window_bounds = array<i64: 74, 33>}, {transform_indices = @transform_2, window_bounds = array<i64: 2, 2>}]} {
    %c0 = arith.constant 0 : index
    %c0_0 = arith.constant 0 : index
    %0 = vector.load %arg1[%c0, %c0_0] : memref<2x4xf32, #tpu.memory_space<vmem>>, vector<2x4xf32>
    %c0_1 = arith.constant 0 : index
    %c0_2 = arith.constant 0 : index
    %1 = vector.load %arg2[%c0_1, %c0_2] : memref<74x33xf32, #tpu.memory_space<vmem>>, vector<33x4xf32>
    %c0_3 = arith.constant 0 : index
    %c4 = arith.constant 4 : index
    %2 = vector.load %arg2[%c0_3, %c4] : memref<74x33xf32, #tpu.memory_space<vmem>>, vector<33x1xf32>
    %cst = arith.constant dense<0.000000e+00> : vector<33x2xf32>
    %3 = tpu.matmul %1, %0, %cst {dimension_numbers = #tpu.dot_dimension_numbers<[1], [1], [0], [0], [0, 0, 1, 0], [], []>} : vector<33x4xf32>, vector<2x4xf32>, vector<33x2xf32> -> vector<33x2xf32>
    %4 = vector.broadcast %2 : vector<33x1xf32> to vector<33x2xf32>
    %5 = arith.addf %3, %4 : vector<33x2xf32>
    %cst_4 = arith.constant 0.000000e+00 : f32
    %6 = vector.broadcast %cst_4 : f32 to vector<33x2xf32>
    %7 = arith.maximumf %5, %6 : vector<33x2xf32>
    %c33 = arith.constant 33 : index
    %c0_5 = arith.constant 0 : index
    %8 = vector.load %arg2[%c33, %c0_5] : memref<74x33xf32, #tpu.memory_space<vmem>>, vector<33x33xf32>
    %cst_6 = arith.constant dense<0.000000e+00> : vector<33x2xf32>
    %9 = tpu.matmul %8, %7, %cst_6 {dimension_numbers = #tpu.dot_dimension_numbers<[1], [0], [0], [1], [0, 0, 1, 1], [], []>} : vector<33x33xf32>, vector<33x2xf32>, vector<33x2xf32> -> vector<33x2xf32>
    %10 = math.tanh %9 : vector<33x2xf32>
    %c66 = arith.constant 66 : index
    %c0_7 = arith.constant 0 : index
    %11 = vector.load %arg2[%c66, %c0_7] : memref<74x33xf32, #tpu.memory_space<vmem>>, vector<8x33xf32>
    %cst_8 = arith.constant dense<0.000000e+00> : vector<8x2xf32>
    %12 = tpu.matmul %11, %10, %cst_8 {dimension_numbers = #tpu.dot_dimension_numbers<[1], [0], [0], [1], [0, 0, 1, 1], [], []>} : vector<8x33xf32>, vector<33x2xf32>, vector<8x2xf32> -> vector<8x2xf32>
    %13 = tpu.transpose %12, [1, 0] : vector<8x2xf32> -> vector<2x8xf32>
    %14 = vector.extract_strided_slice %13 {offsets = [0, 0], sizes = [2, 2], strides = [1, 1]} : vector<2x8xf32> to vector<2x2xf32>
    %c0_9 = arith.constant 0 : index
    %c0_10 = arith.constant 0 : index
    %15 = vector.load %arg3[%c0_9, %c0_10] : memref<2x2xf32, #tpu.memory_space<vmem>>, vector<2x2xf32>
    tpu.vector_store %arg3[%c0_9, %c0_10], %14 {strides = array<i32>} : memref<2x2xf32, #tpu.memory_space<vmem>>, vector<2x2xf32>,
    return
  }
  func.func @transform_0(%arg0: i32) -> (i32, i32) {
    %c0_i32 = arith.constant 0 : i32
    %c0_i32_0 = arith.constant 0 : i32
    return %arg0, %c0_i32 : i32, i32
  }
  func.func @transform_1(%arg0: i32) -> (i32, i32) {
    %c0_i32 = arith.constant 0 : i32
    %c0_i32_0 = arith.constant 0 : i32
    %c0_i32_1 = arith.constant 0 : i32
    return %c0_i32, %c0_i32_0 : i32, i32
  }
  func.func @transform_2(%arg0: i32) -> (i32, i32) {
    %c0_i32 = arith.constant 0 : i32
    %c0_i32_0 = arith.constant 0 : i32
    return %arg0, %c0_i32 : i32, i32
  }
}

</mosaic_0001>

<llo_original>
// kernel: tpu_custom_call.1
$region0: #{tpu_custom_call.1}
  #allocation0 [shape = 'u32[]', space=smem, size = 0x4, offset = 0x4, fixed_abs, tag = 'smem constant byte address 0x4 - core index']
  #allocation1 [shape = 'u32[144,128]{1,0:T(1,128)}', space=vmem, size = 0x12000, scoped, tag = 'internal scratch']
  %s0 = inlined_call_operand.vmem [shape: f32[2,4], index: 0, kind: input, shape index: {}]
  %s1 = inlined_call_operand.vmem [shape: f32[74,33], index: 1, kind: input, shape index: {}]
  %s2 = inlined_call_operand.hbm [shape: f32[2,2], index: 2, kind: output, shape index: {}]
  %s3 = sld [smem:[#allocation0]]
  $region18: #{tpu_custom_call.1} parent=0
    _
  %s5 = ssub.s32 1, %s3
  %s6 = scalar_select 0, %s5, %s3
  $region1: #{tpu_custom_call.1} parent=0
    #allocation2 [shape = 'u8[1024]{0}', space=vmem, size = 0x400, scoped, tag = 'output window, operand 0, single buffered']
    #allocation3 [shape = 's32[1]{0}', space=sflag, size = 0x4, scoped, tag = 'scoped memory for tpu_custom_call.1']
    %7 = vsyncpa [#allocation3], 0
    // Predicated region
    $region2: #{tpu_custom_call.1} parent=1 // pred_check
      _
    $region3: #{tpu_custom_call.1} parent=1 // pred_check_branch
      %9 = sbr.rel (0) target = $region5
    $region4: #{tpu_custom_call.1} parent=1 // pred_region
      _
    $region5: #{tpu_custom_call.1} parent=1 // pred_fallthru
      _
    // Predicated region
    $region6: #{tpu_custom_call.1} parent=1 // pred_check
      _
    $region7: #{tpu_custom_call.1} parent=1 // pred_check_branch
      %11 = sbr.rel (0) target = $region9
    $region8: #{tpu_custom_call.1} parent=1 // pred_region
      _
    $region9: #{tpu_custom_call.1} parent=1 // pred_fallthru
      _
    %v12 = vld [vmem:[%s0] sm:$0x3]
    %v13 = vld [vmem:[%s1] sm:$0xff]
    %v14 = vld [vmem:[%s1 + $0x8] sm:$0xff]
    %v15 = vld [vmem:[%s1 + $0x10] sm:$0xff]
    %v16 = vld [vmem:[%s1 + $0x18] sm:$0xff]
    %v17 = vld [vmem:[%s1 + $0x20] sm:$0x1]
    %19 = vset.pattern.permute.xlu0 4
    %20 = vperm.xlu0 %19, %v13
    %v21 = vpop.permute.xlu0 %20
    %24 = vset.pattern.permute.xlu0 4
    %25 = vperm.xlu0 %24, %v14
    %v26 = vpop.permute.xlu0 %25
    %29 = vset.pattern.permute.xlu0 4
    %30 = vperm.xlu0 %29, %v15
    %v31 = vpop.permute.xlu0 %30
    %34 = vset.pattern.permute.xlu0 4
    %35 = vperm.xlu0 %34, %v16
    %v36 = vpop.permute.xlu0 %35
    %39 = vset.pattern.permute.xlu0 4
    %40 = vperm.xlu0 %39, %v17
    %v41 = vpop.permute.xlu0 %40
    %vm43 = vcmask 31744
    %v44 = vsel %vm43, %v13, 0
    %v46 = vsel %vm43, %v14, 0
    %v48 = vsel %vm43, %v15, 0
    %v50 = vsel %vm43, %v16, 0
    %v52 = vsel %vm43, %v17, 0
    %v55 = vsel %vm43, %v12, 0
    %57 = vmatprep.subr.mxu0 0.0
    %58 = vmatpush1.xpose.msra.mxu0 0.0
    %59 = vmatprep.subr.mxu0 0.0
    %60 = vmatpush1.xpose.msra.mxu0 0.0
    %61 = vmatprep.subr.mxu0 0.0
    %62 = vmatpush1.xpose.msra.mxu0 0.0
    %63 = vmatprep.subr.mxu0 0.0
    %64 = vmatpush1.xpose.msra.mxu0 0.0
    %65 = vmatprep.subr.mxu0 0.0
    %66 = vmatpush1.xpose.msra.mxu0 0.0
    %67 = vmatprep.subr.mxu0 0.0
    %68 = vmatpush1.xpose.msra.mxu0 0.0
    %69 = vmatprep.subr.mxu0 0.0
    %70 = vmatpush1.xpose.msra.mxu0 0.0
    %71 = vmatprep.subr.mxu0 0.0
    %72 = vmatpush1.xpose.msra.mxu0 0.0
    %73 = vmatprep.subr.mxu0 0.0
    %74 = vmatpush1.xpose.msra.mxu0 0.0
    %75 = vmatprep.subr.mxu0 0.0
    %76 = vmatpush1.xpose.msra.mxu0 0.0
    %77 = vmatprep.subr.mxu0 0.0
    %78 = vmatpush1.xpose.msra.mxu0 0.0
    %79 = vmatprep.subr.mxu0 0.0
    %80 = vmatpush1.xpose.msra.mxu0 0.0
    %81 = vmatprep.subr.mxu0 0.0
    %82 = vmatpush1.xpose.msra.mxu0 0.0
    %83 = vmatprep.subr.mxu0 0.0
    %84 = vmatpush1.xpose.msra.mxu0 0.0
    %85 = vmatprep.subr.mxu0 0.0
    %86 = vmatpush1.xpose.msra.mxu0 0.0
    %87 = vmatprep.subr.mxu0 0.0
    %88 = vmatpush1.xpose.msra.mxu0 %v55
    %89 = vmatprep.subr.mxu0 0.0
    %90 = vmatpush2.xpose.msra.mxu0 0.0
    %91 = vmatprep.subr.mxu0 0.0
    %92 = vmatpush2.xpose.msra.mxu0 0.0
    %93 = vmatprep.subr.mxu0 0.0
    %94 = vmatpush2.xpose.msra.mxu0 0.0
    %95 = vmatprep.subr.mxu0 0.0
    %96 = vmatpush2.xpose.msra.mxu0 0.0
    %97 = vmatprep.subr.mxu0 0.0
    %98 = vmatpush2.xpose.msra.mxu0 0.0
    %99 = vmatprep.subr.mxu0 0.0
    %100 = vmatpush2.xpose.msra.mxu0 0.0
    %101 = vmatprep.subr.mxu0 0.0
    %102 = vmatpush2.xpose.msra.mxu0 0.0
    %103 = vmatprep.subr.mxu0 0.0
    %104 = vmatpush2.xpose.msra.mxu0 0.0
    %105 = vmatprep.subr.mxu0 0.0
    %106 = vmatpush2.xpose.msra.mxu0 0.0
    %107 = vmatprep.subr.mxu0 0.0
    %108 = vmatpush2.xpose.msra.mxu0 0.0
    %109 = vmatprep.subr.mxu0 0.0
    %110 = vmatpush2.xpose.msra.mxu0 0.0
    %111 = vmatprep.subr.mxu0 0.0
    %112 = vmatpush2.xpose.msra.mxu0 0.0
    %113 = vmatprep.subr.mxu0 0.0
    %114 = vmatpush2.xpose.msra.mxu0 0.0
    %115 = vmatprep.subr.mxu0 0.0
    %116 = vmatpush2.xpose.msra.mxu0 0.0
    %117 = vmatprep.subr.mxu0 0.0
    %118 = vmatpush2.xpose.msra.mxu0 0.0
    %119 = vmatprep.subr.mxu0 0.0
    %120 = vmatpush2.xpose.msra.mxu0 0.0
    %121 = vmatprep.mubr.f32.mxu0 0.0
    %122 = vmatmul.mubr.f32.gmra.mxu0 %v44
    %v123 = vpop.f32.mrf.mxu0
    %v124 = vadd.f32 %v21, %v123
    %v125 = vpop.f32.mrf.mxu0
    %126 = vmatprep.mubr.f32.mxu0 0.0
    %127 = vmatmul.mubr.f32.gmra.mxu0 %v46
    %v128 = vpop.f32.mrf.mxu0
    %v129 = vadd.f32 %v26, %v128
    %v130 = vpop.f32.mrf.mxu0
    %131 = vmatprep.mubr.f32.mxu0 0.0
    %132 = vmatmul.mubr.f32.gmra.mxu0 %v48
    %v133 = vpop.f32.mrf.mxu0
    %v134 = vadd.f32 %v31, %v133
    %v135 = vpop.f32.mrf.mxu0
    %136 = vmatprep.mubr.f32.mxu0 0.0
    %137 = vmatmul.mubr.f32.gmra.mxu0 %v50
    %v138 = vpop.f32.mrf.mxu0
    %v139 = vadd.f32 %v36, %v138
    %v140 = vpop.f32.mrf.mxu0
    %141 = vmatprep.mubr.f32.mxu0 0.0
    %142 = vmatmul.mubr.f32.gmra.mxu0 %v52
    %v143 = vpop.f32.mrf.mxu0
    %v144 = vadd.f32 %v41, %v143
    %v145 = vpop.f32.mrf.mxu0
    %146 = vdwg.mxu0
    %v147 = vmax.f32 %v124, 0.0
    %v148 = vmax.f32 %v129, 0.0
    %v149 = vmax.f32 %v134, 0.0
    %v150 = vmax.f32 %v139, 0.0
    %v151 = vmax.f32 %v144, 0.0
    %v152 = vld [vmem:[%s1 + $0x21] sm:$0xff]
    %v153 = vld [vmem:[%s1 + $0x29] sm:$0xff]
    %v154 = vld [vmem:[%s1 + $0x31] sm:$0xff]
    %v155 = vld [vmem:[%s1 + $0x39] sm:$0xff]
    %v156 = vld [vmem:[%s1 + $0x41] sm:$0x1]
    %vm157 = vcmask 269312
    %v159 = vsel %vm157, %v152, 0
    %v162 = vsel %vm157, %v153, 0
    %v165 = vsel %vm157, %v154, 0
    %v168 = vsel %vm157, %v155, 0
    %v171 = vsel %vm157, %v156, 0
    %vm173 = vcmask 1040384
    %v175 = vsel %vm173, %v151, 0
    %177 = vmatprep.subr.mxu0 0.0
    %178 = vmatpush1.msra.mxu0 0.0
    %179 = vmatprep.subr.mxu0 0.0
    %180 = vmatpush1.msra.mxu0 0.0
    %181 = vmatprep.subr.mxu0 0.0
    %182 = vmatpush1.msra.mxu0 0.0
    %183 = vmatprep.subr.mxu0 0.0
    %184 = vmatpush1.msra.mxu0 0.0
    %185 = vmatprep.subr.mxu0 0.0
    %186 = vmatpush1.msra.mxu0 0.0
    %187 = vmatprep.subr.mxu0 0.0
    %188 = vmatpush1.msra.mxu0 0.0
    %189 = vmatprep.subr.mxu0 0.0
    %190 = vmatpush1.msra.mxu0 0.0
    %191 = vmatprep.subr.mxu0 0.0
    %192 = vmatpush1.msra.mxu0 0.0
    %193 = vmatprep.subr.mxu0 0.0
    %194 = vmatpush1.msra.mxu0 0.0
    %195 = vmatprep.subr.mxu0 0.0
    %196 = vmatpush1.msra.mxu0 0.0
    %197 = vmatprep.subr.mxu0 0.0
    %198 = vmatpush1.msra.mxu0 0.0
    %199 = vmatprep.subr.mxu0 0.0
    %200 = vmatpush1.msra.mxu0 %v175
    %201 = vmatprep.subr.mxu0 0.0
    %202 = vmatpush1.msra.mxu0 %v150
    %203 = vmatprep.subr.mxu0 0.0
    %204 = vmatpush1.msra.mxu0 %v149
    %205 = vmatprep.subr.mxu0 0.0
    %206 = vmatpush1.msra.mxu0 %v148
    %207 = vmatprep.subr.mxu0 0.0
    %208 = vmatpush1.msra.mxu0 %v147
    %209 = vmatprep.subr.mxu0 0.0
    %210 = vmatpush2.msra.mxu0 0.0
    %211 = vmatprep.subr.mxu0 0.0
    %212 = vmatpush2.msra.mxu0 0.0
    %213 = vmatprep.subr.mxu0 0.0
    %214 = vmatpush2.msra.mxu0 0.0
    %215 = vmatprep.subr.mxu0 0.0
    %216 = vmatpush2.msra.mxu0 0.0
    %217 = vmatprep.subr.mxu0 0.0
    %218 = vmatpush2.msra.mxu0 0.0
    %219 = vmatprep.subr.mxu0 0.0
    %220 = vmatpush2.msra.mxu0 0.0
    %221 = vmatprep.subr.mxu0 0.0
    %222 = vmatpush2.msra.mxu0 0.0
    %223 = vmatprep.subr.mxu0 0.0
    %224 = vmatpush2.msra.mxu0 0.0
    %225 = vmatprep.subr.mxu0 0.0
    %226 = vmatpush2.msra.mxu0 0.0
    %227 = vmatprep.subr.mxu0 0.0
    %228 = vmatpush2.msra.mxu0 0.0
    %229 = vmatprep.subr.mxu0 0.0
    %230 = vmatpush2.msra.mxu0 0.0
    %231 = vmatprep.subr.mxu0 0.0
    %232 = vmatpush2.msra.mxu0 0.0
    %233 = vmatprep.subr.mxu0 0.0
    %234 = vmatpush2.msra.mxu0 0.0
    %235 = vmatprep.subr.mxu0 0.0
    %236 = vmatpush2.msra.mxu0 0.0
    %237 = vmatprep.subr.mxu0 0.0
    %238 = vmatpush2.msra.mxu0 0.0
    %239 = vmatprep.subr.mxu0 0.0
    %240 = vmatpush2.msra.mxu0 0.0
    %241 = vmatprep.mubr.f32.mxu0 0.0
    %242 = vmatmul.mubr.f32.gmra.mxu0 %v159
    %v243 = vpop.f32.mrf.mxu0
    %v244 = vadd.f32 0.0, %v243
    %v245 = vpop.f32.mrf.mxu0
    %246 = vmatprep.mubr.f32.mxu0 0.0
    %247 = vmatmul.mubr.f32.gmra.mxu0 %v162
    %v248 = vpop.f32.mrf.mxu0
    %v249 = vadd.f32 0.0, %v248
    %v250 = vpop.f32.mrf.mxu0
    %251 = vmatprep.mubr.f32.mxu0 0.0
    %252 = vmatmul.mubr.f32.gmra.mxu0 %v165
    %v253 = vpop.f32.mrf.mxu0
    %v254 = vadd.f32 0.0, %v253
    %v255 = vpop.f32.mrf.mxu0
    %256 = vmatprep.mubr.f32.mxu0 0.0
    %257 = vmatmul.mubr.f32.gmra.mxu0 %v168
    %v258 = vpop.f32.mrf.mxu0
    %v259 = vadd.f32 0.0, %v258
    %v260 = vpop.f32.mrf.mxu0
    %261 = vmatprep.mubr.f32.mxu0 0.0
    %262 = vmatmul.mubr.f32.gmra.mxu0 %v171
    %v263 = vpop.f32.mrf.mxu0
    %v264 = vadd.f32 0.0, %v263
    %v265 = vpop.f32.mrf.mxu0
    %266 = vdwg.mxu0
    %v267 = vtanh.pop %v244
    %v268 = vtanh.pop %v249
    %v269 = vtanh.pop %v254
    %v270 = vtanh.pop %v259
    %v271 = vtanh.pop %v264
    %v272 = vld [vmem:[%s1 + $0x42] sm:$0xff]
    %v274 = vsel %vm157, %v272, 0
    %v277 = vsel %vm173, %v271, 0
    %279 = vmatprep.subr.mxu0 0.0
    %280 = vmatpush1.msra.mxu0 0.0
    %281 = vmatprep.subr.mxu0 0.0
    %282 = vmatpush1.msra.mxu0 0.0
    %283 = vmatprep.subr.mxu0 0.0
    %284 = vmatpush1.msra.mxu0 0.0
    %285 = vmatprep.subr.mxu0 0.0
    %286 = vmatpush1.msra.mxu0 0.0
    %287 = vmatprep.subr.mxu0 0.0
    %288 = vmatpush1.msra.mxu0 0.0
    %289 = vmatprep.subr.mxu0 0.0
    %290 = vmatpush1.msra.mxu0 0.0
    %291 = vmatprep.subr.mxu0 0.0
    %292 = vmatpush1.msra.mxu0 0.0
    %293 = vmatprep.subr.mxu0 0.0
    %294 = vmatpush1.msra.mxu0 0.0
    %295 = vmatprep.subr.mxu0 0.0
    %296 = vmatpush1.msra.mxu0 0.0
    %297 = vmatprep.subr.mxu0 0.0
    %298 = vmatpush1.msra.mxu0 0.0
    %299 = vmatprep.subr.mxu0 0.0
    %300 = vmatpush1.msra.mxu0 0.0
    %301 = vmatprep.subr.mxu0 0.0
    %302 = vmatpush1.msra.mxu0 %v277
    %303 = vmatprep.subr.mxu0 0.0
    %304 = vmatpush1.msra.mxu0 %v270
    %305 = vmatprep.subr.mxu0 0.0
    %306 = vmatpush1.msra.mxu0 %v269
    %307 = vmatprep.subr.mxu0 0.0
    %308 = vmatpush1.msra.mxu0 %v268
    %309 = vmatprep.subr.mxu0 0.0
    %310 = vmatpush1.msra.mxu0 %v267
    %311 = vmatprep.subr.mxu0 0.0
    %312 = vmatpush2.msra.mxu0 0.0
    %313 = vmatprep.subr.mxu0 0.0
    %314 = vmatpush2.msra.mxu0 0.0
    %315 = vmatprep.subr.mxu0 0.0
    %316 = vmatpush2.msra.mxu0 0.0
    %317 = vmatprep.subr.mxu0 0.0
    %318 = vmatpush2.msra.mxu0 0.0
    %319 = vmatprep.subr.mxu0 0.0
    %320 = vmatpush2.msra.mxu0 0.0
    %321 = vmatprep.subr.mxu0 0.0
    %322 = vmatpush2.msra.mxu0 0.0
    %323 = vmatprep.subr.mxu0 0.0
    %324 = vmatpush2.msra.mxu0 0.0
    %325 = vmatprep.subr.mxu0 0.0
    %326 = vmatpush2.msra.mxu0 0.0
    %327 = vmatprep.subr.mxu0 0.0
    %328 = vmatpush2.msra.mxu0 0.0
    %329 = vmatprep.subr.mxu0 0.0
    %330 = vmatpush2.msra.mxu0 0.0
    %331 = vmatprep.subr.mxu0 0.0
    %332 = vmatpush2.msra.mxu0 0.0
    %333 = vmatprep.subr.mxu0 0.0
    %334 = vmatpush2.msra.mxu0 0.0
    %335 = vmatprep.subr.mxu0 0.0
    %336 = vmatpush2.msra.mxu0 0.0
    %337 = vmatprep.subr.mxu0 0.0
    %338 = vmatpush2.msra.mxu0 0.0
    %339 = vmatprep.subr.mxu0 0.0
    %340 = vmatpush2.msra.mxu0 0.0
    %341 = vmatprep.subr.mxu0 0.0
    %342 = vmatpush2.msra.mxu0 0.0
    %343 = vmatprep.mubr.f32.mxu0 0.0
    %344 = vmatmul.mubr.f32.gmra.mxu0 %v274
    %v345 = vpop.f32.mrf.mxu0
    %v346 = vadd.f32 0.0, %v345
    %v347 = vpop.f32.mrf.mxu0
    %348 = vdwg.mxu0
    %349 = vxpose.xlu0.b32.start [1/16] %v346, 128
    %350 = vxpose.xlu0.b32.cont [2/16] 0.0, 128
    %351 = vxpose.xlu0.b32.cont [3/16] 0.0, 128
    %352 = vxpose.xlu0.b32.cont [4/16] 0.0, 128
    %353 = vxpose.xlu0.b32.cont [5/16] 0.0, 128
    %354 = vxpose.xlu0.b32.cont [6/16] 0.0, 128
    %355 = vxpose.xlu0.b32.cont [7/16] 0.0, 128
    %356 = vxpose.xlu0.b32.cont [8/16] 0.0, 128
    %357 = vxpose.xlu0.b32.cont [9/16] 0.0, 128
    %358 = vxpose.xlu0.b32.cont [10/16] 0.0, 128
    %359 = vxpose.xlu0.b32.cont [11/16] 0.0, 128
    %360 = vxpose.xlu0.b32.cont [12/16] 0.0, 128
    %361 = vxpose.xlu0.b32.cont [13/16] 0.0, 128
    %362 = vxpose.xlu0.b32.cont [14/16] 0.0, 128
    %363 = vxpose.xlu0.b32.cont [15/16] 0.0, 128
    %364 = vxpose.xlu0.b32.end [16/16] 0.0, 128
    %v365 = vpop.trf.xlu0
    %v366 = vpop.trf.xlu0
    %v367 = vpop.trf.xlu0
    %v368 = vpop.trf.xlu0
    %v369 = vpop.trf.xlu0
    %v370 = vpop.trf.xlu0
    %v371 = vpop.trf.xlu0
    %v372 = vpop.trf.xlu0
    %v373 = vpop.trf.xlu0
    %v374 = vpop.trf.xlu0
    %v375 = vpop.trf.xlu0
    %v376 = vpop.trf.xlu0
    %v377 = vpop.trf.xlu0
    %v378 = vpop.trf.xlu0
    %v379 = vpop.trf.xlu0
    %v380 = vpop.trf.xlu0
    %vm381 = vcmask 9216
    %382 = vst.msk [vmem:[#allocation2] sm:$0x3] %vm381, %v365
    // Predicated region
    $region10: #{tpu_custom_call.1} parent=1 // pred_check
      _
    $region11: #{tpu_custom_call.1} parent=1 // pred_check_branch
      %384 = sbr.rel (0) target = $region13
    $region12: #{tpu_custom_call.1} parent=1 // pred_region
      %s386 = ssub.s32 32, 32
      %387 = vsyncadd [#allocation3], %s386
      %s389 = sshll.u32 [#allocation2], 4
      %s390 = int_to_ptr.vmem [resolvable:$true] %s389
      %392 = dma.vmem_to_hbm [thread:$0]  %s390, 32, %s2, [#allocation3]
    $region13: #{tpu_custom_call.1} parent=1 // pred_fallthru
      _
    // Predicated region
    $region14: #{tpu_custom_call.1} parent=1 // pred_check
      _
    $region15: #{tpu_custom_call.1} parent=1 // pred_check_branch
      %394 = sbr.rel (0) target = $region17
    $region16: #{tpu_custom_call.1} parent=1 // pred_region
      %395 = dma.done [#allocation3], 32
    $region17: #{tpu_custom_call.1} parent=1 // pred_fallthru
      _
    %396 = vsyncpa [#allocation3], 1

</llo_original>
